<compile_context>
chip_gen: v5e
topology: v5e:2x2
jax: 0.10.0
libtpu: 0.0.40
codegen_flags: <defaults>
</compile_context>

<pallas_src>
import functools

import jax
import jax.numpy as jnp
from jax import lax
from jax.experimental import pallas as pl
from jax.experimental.pallas import tpu as pltpu


def _round_up(x, m):
    return ((x + m - 1) // m) * m


@functools.lru_cache(maxsize=None)
def _batch_axis_semantics():
    """CORE_PARALLEL if this build/chip accepts it (splits the batch-tile grid
    across v7x's two TensorCores; effectively a no-op on single-core v5e/v6e),
    otherwise plain "parallel".  Probed once with a tiny kernel so the main
    kernel never fails to compile on older stacks."""
    core_parallel = getattr(pltpu, "CORE_PARALLEL", None)
    if core_parallel is None:
        return "parallel"

    def _probe(x_ref, w_ref, o_ref):
        o_ref[...] = x_ref[...] + w_ref[...]

    try:
        out = pl.pallas_call(
            _probe,
            out_shape=jax.ShapeDtypeStruct((16, 128), jnp.float32),
            grid=(2,),
            in_specs=[pl.BlockSpec((8, 128), lambda i: (i, 0)),
                      pl.BlockSpec((8, 128), lambda i: (0, 0))],
            out_specs=pl.BlockSpec((8, 128), lambda i: (i, 0)),
            compiler_params=pltpu.CompilerParams(
                dimension_semantics=(core_parallel,)),
        )(jnp.zeros((16, 128), jnp.float32), jnp.zeros((8, 128), jnp.float32))
        jax.block_until_ready(out)
        return core_parallel
    except Exception:  # pragma: no cover - older jax/libtpu builds
        return "parallel"


def _policy_kernel_natural(x_ref, w1_ref, b1_ref, w2_ref, b2_ref, w3t_ref,
                           b3_ref, o_ref, *, output_dim):
    """Hidden layers run in transposed space (batch on the 128-lane axis);
    the last layer is produced directly in natural (tb, 2*D) layout so no
    wrapper-side output transpose pass is needed."""
    x = x_ref[...]                                          # (tb, input_dim)
    # h1^T = relu(W1 @ x^T + b1): contract the feature dims directly, so the
    # MXU consumes x in natural layout (no explicit XLU transpose, no pad).
    h1 = lax.dot_general(w1_ref[...], x, (((1,), (1,)), ((), ())),
                         preferred_element_type=jnp.float32) + b1_ref[...]
    h1 = jnp.maximum(h1, 0.0)                               # (hidden, tb)
    h2 = jnp.dot(w2_ref[...], h1,
                 preferred_element_type=jnp.float32) + b2_ref[...]
    h2 = jnp.maximum(h2, 0.0)                               # (hidden, tb)
    # y = h2 @ W3^T + b3 in natural layout (transposed-LHS matmul on the MXU).
    y = lax.dot_general(h2, w3t_ref[...], (((0,), (0,)), ((), ())),
                        preferred_element_type=jnp.float32) + b3_ref[...]
    # concat([y[:, :D], sigmoid(y[:, D:])], dim=1) == column-masked sigmoid.
    cols = lax.broadcasted_iota(jnp.int32, y.shape, 1)
    o_ref[...] = jnp.where(cols < output_dim, y,
                           jax.nn.sigmoid(y)).astype(o_ref.dtype)


def _policy_kernel_transposed(x_ref, w1_ref, b1_ref, w2_ref, b2_ref, w3_ref,
                              b3_ref, o_ref, *, output_dim):
    """Same math, but the output stays transposed (2*D, tb): fully lane-dense
    stores and zero extra passes -- preferred on v5e or when the consumer can
    take y^T."""
    x = x_ref[...]                                          # (tb, input_dim)
    h1 = lax.dot_general(w1_ref[...], x, (((1,), (1,)), ((), ())),
                         preferred_element_type=jnp.float32) + b1_ref[...]
    h1 = jnp.maximum(h1, 0.0)
    h2 = jnp.dot(w2_ref[...], h1,
                 preferred_element_type=jnp.float32) + b2_ref[...]
    h2 = jnp.maximum(h2, 0.0)
    y = jnp.dot(w3_ref[...], h2,
                preferred_element_type=jnp.float32) + b3_ref[...]   # (2D, tb)
    rows = lax.broadcasted_iota(jnp.int32, y.shape, 0)
    o_ref[...] = jnp.where(rows < output_dim, y,
                           jax.nn.sigmoid(y)).astype(o_ref.dtype)


def _choose_batch_tile(batch, block_batch):
    """Either one full-array block (small batch) or a multiple-of-128 tile
    <= block_batch, preferring >= 2 tiles so a core-parallel grid has
    something to split across v7x's TensorCores."""
    if batch <= 256:
        return batch
    return min(block_batch, _round_up(pl.cdiv(batch, 2), 128))


def continuous_policy_with_std(x, params, output_dim, *, block_batch=8192,
                               transposed_output=False):
    """Forward pass of ContinuousPolicyWithStd.

    x:       (batch, input_dim); f32, or bf16 on v6e/v7x to halve the HBM
             stream (accumulation stays f32 in-kernel).
    params:  (w1, b1, w2, b2, w3, b3); weights in PyTorch (out, in) layout,
             biases shaped (out, 1).
    returns: (batch, 2*output_dim) f32, or (2*output_dim, batch) if
             transposed_output=True.
    """
    w1, b1, w2, b2, w3, b3 = params
    batch, input_dim = x.shape
    hidden = w1.shape[0]
    out_features = w3.shape[0]          # = 2 * output_dim

    tb = _choose_batch_tile(batch, block_batch)
    pad_rows = 0
    if tb == batch and batch % 8 != 0:
        # Tiny batches only: pad up to a sublane multiple (a few rows, ~free).
        # Large batches never pad -- ragged tails use partial boundary blocks.
        pad_rows = _round_up(batch, 8) - batch
        x = jnp.pad(x, ((0, pad_rows), (0, 0)))
        tb = batch + pad_rows
    padded_batch = batch + pad_rows
    num_tiles = pl.cdiv(padded_batch, tb)

    const = lambda i: (0, 0)            # weights/biases stay VMEM-resident
    w_specs = [
        pl.BlockSpec((hidden, input_dim), const),
        pl.BlockSpec((hidden, 1), const),
        pl.BlockSpec((hidden, hidden), const),
        pl.BlockSpec((hidden, 1), const),
    ]

    if transposed_output:
        kernel = functools.partial(_policy_kernel_transposed, output_dim=output_dim)
        w3_k, b3_k = w3, b3
        w3_specs = [pl.BlockSpec((out_features, hidden), const),
                    pl.BlockSpec((out_features, 1), const)]
        out_shape = jax.ShapeDtypeStruct((out_features, padded_batch), jnp.float32)
        out_spec = pl.BlockSpec((out_features, tb), lambda i: (0, i))
    else:
        kernel = functools.partial(_policy_kernel_natural, output_dim=output_dim)
        # Tiny one-time relayout of the last layer's params (32x8, negligible).
        w3_k, b3_k = w3.T, b3.reshape(1, out_features)
        w3_specs = [pl.BlockSpec((hidden, out_features), const),
                    pl.BlockSpec((1, out_features), const)]
        out_shape = jax.ShapeDtypeStruct((padded_batch, out_features), jnp.float32)
        out_spec = pl.BlockSpec((tb, out_features), lambda i: (i, 0))

    cost = pl.CostEstimate(
        flops=2 * batch * (input_dim * hidden + hidden * hidden
                           + hidden * out_features),
        transcendentals=batch * output_dim,       # only the std half is sigmoided
        bytes_accessed=int(x.size) * x.dtype.itemsize
                       + batch * out_features * 4
                       + sum(int(p.size) * p.dtype.itemsize for p in params),
    )

    semantics = _batch_axis_semantics() if num_tiles > 1 else "arbitrary"

    result = pl.pallas_call(
        kernel,
        out_shape=out_shape,
        grid=(num_tiles,),
        in_specs=[pl.BlockSpec((tb, input_dim), lambda i: (i, 0))]
                 + w_specs + w3_specs,
        out_specs=out_spec,
        compiler_params=pltpu.CompilerParams(
            dimension_semantics=(semantics,),
            vmem_limit_bytes=32 * 1024 * 1024,   # safe on v5e/v6e/v7x; tiles ~few MiB
        ),
        cost_estimate=cost,
    )(x, w1, b1, w2, b2, w3_k, b3_k)

    if pad_rows:
        return result[:, :batch] if transposed_output else result[:batch]
    return result


def init_params(key, input_dim, output_dim, hidden_size=32):
    """PyTorch-style Linear init; weights in (out, in) layout, biases (out, 1)."""
    def linear(k, fan_in, fan_out):
        kw, kb = jax.random.split(k)
        bound = 1.0 / jnp.sqrt(fan_in)
        w = jax.random.uniform(kw, (fan_out, fan_in), jnp.float32, -bound, bound)
        b = jax.random.uniform(kb, (fan_out, 1), jnp.float32, -bound, bound)
        return w, b

    k1, k2, k3 = jax.random.split(key, 3)
    w1, b1 = linear(k1, input_dim, hidden_size)
    w2, b2 = linear(k2, hidden_size, hidden_size)
    w3, b3 = linear(k3, hidden_size, output_dim * 2)
    return (w1, b1, w2, b2, w3, b3)


def _reference(x, params, output_dim):
    """Pure-JAX reference of the PyTorch forward (x @ W^T + b)."""
    w1, b1, w2, b2, w3, b3 = params
    h1 = jnp.maximum(x @ w1.T + b1.T, 0.0)
    h2 = jnp.maximum(h1 @ w2.T + b2.T, 0.0)
    y = h2 @ w3.T + b3.T
    return jnp.concatenate(
        [y[:, :output_dim], jax.nn.sigmoid(y[:, output_dim:])], axis=1)


if __name__ == "__main__":
    key = jax.random.PRNGKey(0)
    kx, kp, kx2 = jax.random.split(key, 3)

    input_dim, hidden_size, output_dim = 16, 32, 4
    params = init_params(kp, input_dim, output_dim, hidden_size)

    # 1) Small-batch sanity check (single block, matches the module's scale).
    x_small = jax.random.normal(kx, (2, input_dim), jnp.float32)
    out = jax.block_until_ready(
        continuous_policy_with_std(x_small, params, output_dim))
    ref = _reference(x_small, params, output_dim)
    assert out.shape == (2, 2 * output_dim), out.shape
    assert jnp.allclose(out, ref, atol=2e-5, rtol=2e-5), jnp.abs(out - ref).max()

    # 2) Multi-tile batch with a ragged tail (partial boundary block) on the
    #    core-parallel grid path.
    x_big = jax.random.normal(kx2, (300, input_dim), jnp.float32)
    out_big = jax.block_until_ready(
        continuous_policy_with_std(x_big, params, output_dim))
    ref_big = _reference(x_big, params, output_dim)
    assert out_big.shape == (300, 2 * output_dim), out_big.shape
    assert jnp.allclose(out_big, ref_big, atol=2e-5, rtol=2e-5), (
        jnp.abs(out_big - ref_big).max())

    # 3) Transposed-output path (v5e-preferred / consumers that take y^T).
    out_t = jax.block_until_ready(
        continuous_policy_with_std(x_big, params, output_dim,
                                   transposed_output=True))
    assert out_t.shape == (2 * output_dim, 300), out_t.shape
    assert jnp.allclose(out_t, ref_big.T, atol=2e-5, rtol=2e-5), (
        jnp.abs(out_t - ref_big.T).max())

    # 4) bf16 streaming path (v6e/v7x HBM halving); f32 accumulation inside.
    x_bf16 = x_big[:256].astype(jnp.bfloat16)
    params_bf16 = jax.tree.map(lambda p: p.astype(jnp.bfloat16), params)
    out_bf16 = jax.block_until_ready(
        continuous_policy_with_std(x_bf16, params_bf16, output_dim))
    ref_bf16 = _reference(
        x_bf16.astype(jnp.float32),
        jax.tree.map(lambda p: p.astype(jnp.float32), params_bf16), output_dim)
    assert out_bf16.shape == (256, 2 * output_dim), out_bf16.shape
    assert jnp.allclose(out_bf16, ref_bf16, atol=2e-2, rtol=2e-2), (
        jnp.abs(out_bf16 - ref_bf16).max())

    print("KERNEL_OK")
</pallas_src>

<mosaic_0001>
module attributes {stable_mosaic.version = 11 : i64} {
  func.func @_policy_kernel_natural(%arg0: i32, %arg1: memref<8x16xf32, #tpu.memory_space<vmem>>, %arg2: memref<32x16xf32, #tpu.memory_space<vmem>>, %arg3: memref<32x1xf32, #tpu.memory_space<vmem>>, %arg4: memref<32x32xf32, #tpu.memory_space<vmem>>, %arg5: memref<32x1xf32, #tpu.memory_space<vmem>>, %arg6: memref<32x8xf32, #tpu.memory_space<vmem>>, %arg7: memref<1x8xf32, #tpu.memory_space<vmem>>, %arg8: memref<8x8xf32, #tpu.memory_space<vmem>>) attributes {dimension_semantics = [#tpu.dimension_semantics<arbitrary>], iteration_bounds = array<i64: 1>, scalar_prefetch = 0 : i64, scratch_operands = 0 : i64, tpu.core_type = #tpu.core_type<tc>, window_params = [{transform_indices = @transform_0, window_bounds = array<i64: 8, 16>}, {pipeline_mode = #tpu.pipeline_mode<synchronous>, transform_indices = @transform_1, window_bounds = array<i64: 32, 16>}, {pipeline_mode = #tpu.pipeline_mode<synchronous>, transform_indices = @transform_2, window_bounds = array<i64: 32, 1>}, {pipeline_mode = #tpu.pipeline_mode<synchronous>, transform_indices = @transform_3, window_bounds = array<i64: 32, 32>}, {pipeline_mode = #tpu.pipeline_mode<synchronous>, transform_indices = @transform_4, window_bounds = array<i64: 32, 1>}, {pipeline_mode = #tpu.pipeline_mode<synchronous>, transform_indices = @transform_5, window_bounds = array<i64: 32, 8>}, {pipeline_mode = #tpu.pipeline_mode<synchronous>, transform_indices = @transform_6, window_bounds = array<i64: 1, 8>}, {transform_indices = @transform_7, window_bounds = array<i64: 8, 8>}]} {
    %c0 = arith.constant 0 : index
    %c0_0 = arith.constant 0 : index
    %0 = vector.load %arg1[%c0, %c0_0] : memref<8x16xf32, #tpu.memory_space<vmem>>, vector<8x16xf32>
    %c0_1 = arith.constant 0 : index
    %c0_2 = arith.constant 0 : index
    %1 = vector.load %arg2[%c0_1, %c0_2] : memref<32x16xf32, #tpu.memory_space<vmem>>, vector<32x16xf32>
    %cst = arith.constant dense<0.000000e+00> : vector<32x8xf32>
    %2 = tpu.matmul %1, %0, %cst {dimension_numbers = #tpu.dot_dimension_numbers<[1], [1], [0], [0], [0, 0, 1, 0], [], []>} : vector<32x16xf32>, vector<8x16xf32>, vector<32x8xf32> -> vector<32x8xf32>
    %c0_3 = arith.constant 0 : index
    %c0_4 = arith.constant 0 : index
    %3 = vector.load %arg3[%c0_3, %c0_4] : memref<32x1xf32, #tpu.memory_space<vmem>>, vector<32x1xf32>
    %4 = vector.broadcast %3 : vector<32x1xf32> to vector<32x8xf32>
    %5 = arith.addf %2, %4 : vector<32x8xf32>
    %cst_5 = arith.constant 0.000000e+00 : f32
    %6 = vector.broadcast %cst_5 : f32 to vector<32x8xf32>
    %7 = arith.maximumf %5, %6 : vector<32x8xf32>
    %c0_6 = arith.constant 0 : index
    %c0_7 = arith.constant 0 : index
    %8 = vector.load %arg4[%c0_6, %c0_7] : memref<32x32xf32, #tpu.memory_space<vmem>>, vector<32x32xf32>
    %cst_8 = arith.constant dense<0.000000e+00> : vector<32x8xf32>
    %9 = tpu.matmul %8, %7, %cst_8 {dimension_numbers = #tpu.dot_dimension_numbers<[1], [0], [0], [1], [0, 0, 1, 1], [], []>} : vector<32x32xf32>, vector<32x8xf32>, vector<32x8xf32> -> vector<32x8xf32>
    %c0_9 = arith.constant 0 : index
    %c0_10 = arith.constant 0 : index
    %10 = vector.load %arg5[%c0_9, %c0_10] : memref<32x1xf32, #tpu.memory_space<vmem>>, vector<32x1xf32>
    %11 = vector.broadcast %10 : vector<32x1xf32> to vector<32x8xf32>
    %12 = arith.addf %9, %11 : vector<32x8xf32>
    %cst_11 = arith.constant 0.000000e+00 : f32
    %13 = vector.broadcast %cst_11 : f32 to vector<32x8xf32>
    %14 = arith.maximumf %12, %13 : vector<32x8xf32>
    %c0_12 = arith.constant 0 : index
    %c0_13 = arith.constant 0 : index
    %15 = vector.load %arg6[%c0_12, %c0_13] : memref<32x8xf32, #tpu.memory_space<vmem>>, vector<32x8xf32>
    %cst_14 = arith.constant dense<0.000000e+00> : vector<8x8xf32>
    %16 = tpu.matmul %14, %15, %cst_14 {dimension_numbers = #tpu.dot_dimension_numbers<[0], [0], [1], [1], [0, 1, 1, 1], [], []>} : vector<32x8xf32>, vector<32x8xf32>, vector<8x8xf32> -> vector<8x8xf32>
    %c0_15 = arith.constant 0 : index
    %c0_16 = arith.constant 0 : index
    %17 = vector.load %arg7[%c0_15, %c0_16] : memref<1x8xf32, #tpu.memory_space<vmem>>, vector<1x8xf32>
    %18 = vector.broadcast %17 : vector<1x8xf32> to vector<8x8xf32>
    %19 = arith.addf %16, %18 : vector<8x8xf32>
    %20 = tpu.iota {dimensions = array<i32: 1>} : vector<8x8xi32>
    %c4_i32 = arith.constant 4 : i32
    %21 = vector.broadcast %c4_i32 : i32 to vector<8x8xi32>
    %22 = arith.cmpi slt, %20, %21 : vector<8x8xi32>
    %23 = arith.negf %19 : vector<8x8xf32>
    %24 = math.exp %23 : vector<8x8xf32>
    %cst_17 = arith.constant 1.000000e+00 : f32
    %25 = vector.broadcast %cst_17 : f32 to vector<8x8xf32>
    %26 = arith.addf %25, %24 : vector<8x8xf32>
    %27 = arith.divf %25, %26 : vector<8x8xf32>
    %28 = arith.select %22, %19, %27 : vector<8x8xi1>, vector<8x8xf32>
    %c0_18 = arith.constant 0 : index
    %c0_19 = arith.constant 0 : index
    %29 = vector.load %arg8[%c0_18, %c0_19] : memref<8x8xf32, #tpu.memory_space<vmem>>, vector<8x8xf32>
    tpu.vector_store %arg8[%c0_18, %c0_19], %28 {strides = array<i32>} : memref<8x8xf32, #tpu.memory_space<vmem>>, vector<8x8xf32>,
    return
  }
  func.func @transform_0(%arg0: i32) -> (i32, i32) {
    %c0_i32 = arith.constant 0 : i32
    %c0_i32_0 = arith.constant 0 : i32
    return %arg0, %c0_i32 : i32, i32
  }
  func.func @transform_1(%arg0: i32) -> (i32, i32) {
    %c0_i32 = arith.constant 0 : i32
    %c0_i32_0 = arith.constant 0 : i32
    %c0_i32_1 = arith.constant 0 : i32
    return %c0_i32, %c0_i32_0 : i32, i32
  }
  func.func @transform_2(%arg0: i32) -> (i32, i32) {
    %c0_i32 = arith.constant 0 : i32
    %c0_i32_0 = arith.constant 0 : i32
    %c0_i32_1 = arith.constant 0 : i32
    return %c0_i32, %c0_i32_0 : i32, i32
  }
  func.func @transform_3(%arg0: i32) -> (i32, i32) {
    %c0_i32 = arith.constant 0 : i32
    %c0_i32_0 = arith.constant 0 : i32
    %c0_i32_1 = arith.constant 0 : i32
    return %c0_i32, %c0_i32_0 : i32, i32
  }
  func.func @transform_4(%arg0: i32) -> (i32, i32) {
    %c0_i32 = arith.constant 0 : i32
    %c0_i32_0 = arith.constant 0 : i32
    %c0_i32_1 = arith.constant 0 : i32
    return %c0_i32, %c0_i32_0 : i32, i32
  }
  func.func @transform_5(%arg0: i32) -> (i32, i32) {
    %c0_i32 = arith.constant 0 : i32
    %c0_i32_0 = arith.constant 0 : i32
    %c0_i32_1 = arith.constant 0 : i32
    return %c0_i32, %c0_i32_0 : i32, i32
  }
  func.func @transform_6(%arg0: i32) -> (i32, i32) {
    %c0_i32 = arith.constant 0 : i32
    %c0_i32_0 = arith.constant 0 : i32
    %c0_i32_1 = arith.constant 0 : i32
    return %c0_i32, %c0_i32_0 : i32, i32
  }
  func.func @transform_7(%arg0: i32) -> (i32, i32) {
    %c0_i32 = arith.constant 0 : i32
    %c0_i32_0 = arith.constant 0 : i32
    return %arg0, %c0_i32 : i32, i32
  }
}

</mosaic_0001>

<llo_original>
// kernel: tpu_custom_call.1
$region0: #{tpu_custom_call.1}
  #allocation0 [shape = 'u32[]', space=smem, size = 0x4, offset = 0x4, fixed_abs, tag = 'smem constant byte address 0x4 - core index']
  #allocation1 [shape = 'u32[72,128]{1,0:T(1,128)}', space=vmem, size = 0x9000, scoped, tag = 'internal scratch']
  %s0 = inlined_call_operand.vmem [shape: f32[8,16], index: 0, kind: input, shape index: {}]
  %s1 = inlined_call_operand.vmem [shape: f32[32,16], index: 1, kind: input, shape index: {}]
  %s2 = inlined_call_operand.vmem [shape: f32[32,1], index: 2, kind: input, shape index: {}]
  %s3 = inlined_call_operand.vmem [shape: f32[32,32], index: 3, kind: input, shape index: {}]
  %s4 = inlined_call_operand.vmem [shape: f32[32,1], index: 4, kind: input, shape index: {}]
  %s5 = inlined_call_operand.vmem [shape: f32[32,8], index: 5, kind: input, shape index: {}]
  %s6 = inlined_call_operand.vmem [shape: f32[1,8], index: 6, kind: input, shape index: {}]
  %s7 = inlined_call_operand.hbm [shape: f32[8,8], index: 7, kind: output, shape index: {}]
  %s8 = sld [smem:[#allocation0]]
  $region38: #{tpu_custom_call.1} parent=0
    _
  %s10 = ssub.s32 1, %s8
  %s11 = scalar_select 0, %s10, %s8
  $region1: #{tpu_custom_call.1} parent=0
    #allocation2 [shape = 'u8[4096]{0}', space=vmem, size = 0x1000, scoped, tag = 'output window, operand 0, single buffered']
    #allocation3 [shape = 's32[1]{0}', space=sflag, size = 0x4, scoped, tag = 'scoped memory for tpu_custom_call.1']
    %12 = vsyncpa [#allocation3], 0
    // Predicated region
    $region2: #{tpu_custom_call.1} parent=1 // pred_check
      _
    $region3: #{tpu_custom_call.1} parent=1 // pred_check_branch
      %14 = sbr.rel (0) target = $region5
    $region4: #{tpu_custom_call.1} parent=1 // pred_region
      _
    $region5: #{tpu_custom_call.1} parent=1 // pred_fallthru
      _
    // Predicated region
    $region6: #{tpu_custom_call.1} parent=1 // pred_check
      _
    $region7: #{tpu_custom_call.1} parent=1 // pred_check_branch
      %16 = sbr.rel (0) target = $region9
    $region8: #{tpu_custom_call.1} parent=1 // pred_region
      _
    $region9: #{tpu_custom_call.1} parent=1 // pred_fallthru
      _
    // Predicated region
    $region10: #{tpu_custom_call.1} parent=1 // pred_check
      _
    $region11: #{tpu_custom_call.1} parent=1 // pred_check_branch
      %18 = sbr.rel (0) target = $region13
    $region12: #{tpu_custom_call.1} parent=1 // pred_region
      _
    $region13: #{tpu_custom_call.1} parent=1 // pred_fallthru
      _
    // Predicated region
    $region14: #{tpu_custom_call.1} parent=1 // pred_check
      _
    $region15: #{tpu_custom_call.1} parent=1 // pred_check_branch
      %20 = sbr.rel (0) target = $region17
    $region16: #{tpu_custom_call.1} parent=1 // pred_region
      _
    $region17: #{tpu_custom_call.1} parent=1 // pred_fallthru
      _
    // Predicated region
    $region18: #{tpu_custom_call.1} parent=1 // pred_check
      _
    $region19: #{tpu_custom_call.1} parent=1 // pred_check_branch
      %22 = sbr.rel (0) target = $region21
    $region20: #{tpu_custom_call.1} parent=1 // pred_region
      _
    $region21: #{tpu_custom_call.1} parent=1 // pred_fallthru
      _
    // Predicated region
    $region22: #{tpu_custom_call.1} parent=1 // pred_check
      _
    $region23: #{tpu_custom_call.1} parent=1 // pred_check_branch
      %24 = sbr.rel (0) target = $region25
    $region24: #{tpu_custom_call.1} parent=1 // pred_region
      _
    $region25: #{tpu_custom_call.1} parent=1 // pred_fallthru
      _
    // Predicated region
    $region26: #{tpu_custom_call.1} parent=1 // pred_check
      _
    $region27: #{tpu_custom_call.1} parent=1 // pred_check_branch
      %26 = sbr.rel (0) target = $region29
    $region28: #{tpu_custom_call.1} parent=1 // pred_region
      _
    $region29: #{tpu_custom_call.1} parent=1 // pred_fallthru
      _
    %v27 = vld [vmem:[%s0] sm:$0xff]
    %v28 = vld [vmem:[%s1] sm:$0xff]
    %v29 = vld [vmem:[%s1 + $0x8] sm:$0xff]
    %v30 = vld [vmem:[%s1 + $0x10] sm:$0xff]
    %v31 = vld [vmem:[%s1 + $0x18] sm:$0xff]
    %v32 = vld [vmem:[%s2] sm:$0xff]
    %v33 = vld [vmem:[%s2 + $0x8] sm:$0xff]
    %v34 = vld [vmem:[%s2 + $0x10] sm:$0xff]
    %v35 = vld [vmem:[%s2 + $0x18] sm:$0xff]
    %37 = vset.pattern.permute.xlu0 0
    %38 = vperm.xlu0 %37, %v32
    %v39 = vpop.permute.xlu0 %38
    %42 = vset.pattern.permute.xlu0 0
    %43 = vperm.xlu0 %42, %v33
    %v44 = vpop.permute.xlu0 %43
    %47 = vset.pattern.permute.xlu0 0
    %48 = vperm.xlu0 %47, %v34
    %v49 = vpop.permute.xlu0 %48
    %52 = vset.pattern.permute.xlu0 0
    %53 = vperm.xlu0 %52, %v35
    %v54 = vpop.permute.xlu0 %53
    %vm56 = vcmask 130048
    %v58 = vsel %vm56, %v28, 0
    %v61 = vsel %vm56, %v29, 0
    %v64 = vsel %vm56, %v30, 0
    %v67 = vsel %vm56, %v31, 0
    %v70 = vsel %vm56, %v27, 0
    %72 = vmatpush.xpose.msra.mxu0 0.0
    %73 = vmatpush.xpose.msra.mxu0 0.0
    %74 = vmatpush.xpose.msra.mxu0 0.0
    %75 = vmatpush.xpose.msra.mxu0 0.0
    %76 = vmatpush.xpose.msra.mxu0 0.0
    %77 = vmatpush.xpose.msra.mxu0 0.0
    %78 = vmatpush.xpose.msra.mxu0 0.0
    %79 = vmatpush.xpose.msra.mxu0 0.0
    %80 = vmatpush.xpose.msra.mxu0 0.0
    %81 = vmatpush.xpose.msra.mxu0 0.0
    %82 = vmatpush.xpose.msra.mxu0 0.0
    %83 = vmatpush.xpose.msra.mxu0 0.0
    %84 = vmatpush.xpose.msra.mxu0 0.0
    %85 = vmatpush.xpose.msra.mxu0 0.0
    %86 = vmatpush.xpose.msra.mxu0 0.0
    %87 = vmatpush.xpose.msra.mxu0 %v70
    %88 = vmatmul.f32.gmra.mxu0 %v58
    %v89 = vpop.f32.mrf.mxu0
    %v90 = vadd.f32 %v39, %v89
    %91 = vmatmul.f32.gmra.mxu0 %v61
    %v92 = vpop.f32.mrf.mxu0
    %v93 = vadd.f32 %v44, %v92
    %94 = vmatmul.f32.gmra.mxu0 %v64
    %v95 = vpop.f32.mrf.mxu0
    %v96 = vadd.f32 %v49, %v95
    %97 = vmatmul.f32.gmra.mxu0 %v67
    %v98 = vpop.f32.mrf.mxu0
    %v99 = vadd.f32 %v54, %v98
    %100 = vdwg.mxu0
    %v101 = vmax.f32 %v90, 0.0
    %v102 = vmax.f32 %v93, 0.0
    %v103 = vmax.f32 %v96, 0.0
    %v104 = vmax.f32 %v99, 0.0
    %v105 = vld [vmem:[%s3] sm:$0xff]
    %v106 = vld [vmem:[%s3 + $0x8] sm:$0xff]
    %v107 = vld [vmem:[%s3 + $0x10] sm:$0xff]
    %v108 = vld [vmem:[%s3 + $0x18] sm:$0xff]
    %v109 = vld [vmem:[%s4] sm:$0xff]
    %v110 = vld [vmem:[%s4 + $0x8] sm:$0xff]
    %v111 = vld [vmem:[%s4 + $0x10] sm:$0xff]
    %v112 = vld [vmem:[%s4 + $0x18] sm:$0xff]
    %114 = vset.pattern.permute.xlu0 0
    %115 = vperm.xlu0 %114, %v109
    %v116 = vpop.permute.xlu0 %115
    %119 = vset.pattern.permute.xlu0 0
    %120 = vperm.xlu0 %119, %v110
    %v121 = vpop.permute.xlu0 %120
    %124 = vset.pattern.permute.xlu0 0
    %125 = vperm.xlu0 %124, %v111
    %v126 = vpop.permute.xlu0 %125
    %129 = vset.pattern.permute.xlu0 0
    %130 = vperm.xlu0 %129, %v112
    %v131 = vpop.permute.xlu0 %130
    %vm133 = vcmask 261120
    %v135 = vsel %vm133, %v105, 0
    %v138 = vsel %vm133, %v106, 0
    %v141 = vsel %vm133, %v107, 0
    %v144 = vsel %vm133, %v108, 0
    %146 = vmatpush.msra.mxu0 0.0
    %147 = vmatpush.msra.mxu0 0.0
    %148 = vmatpush.msra.mxu0 0.0
    %149 = vmatpush.msra.mxu0 0.0
    %150 = vmatpush.msra.mxu0 0.0
    %151 = vmatpush.msra.mxu0 0.0
    %152 = vmatpush.msra.mxu0 0.0
    %153 = vmatpush.msra.mxu0 0.0
    %154 = vmatpush.msra.mxu0 0.0
    %155 = vmatpush.msra.mxu0 0.0
    %156 = vmatpush.msra.mxu0 0.0
    %157 = vmatpush.msra.mxu0 0.0
    %158 = vmatpush.msra.mxu0 %v104
    %159 = vmatpush.msra.mxu0 %v103
    %160 = vmatpush.msra.mxu0 %v102
    %161 = vmatpush.msra.mxu0 %v101
    %162 = vmatmul.f32.gmra.mxu0 %v135
    %v163 = vpop.f32.mrf.mxu0
    %v164 = vadd.f32 %v116, %v163
    %165 = vmatmul.f32.gmra.mxu0 %v138
    %v166 = vpop.f32.mrf.mxu0
    %v167 = vadd.f32 %v121, %v166
    %168 = vmatmul.f32.gmra.mxu0 %v141
    %v169 = vpop.f32.mrf.mxu0
    %v170 = vadd.f32 %v126, %v169
    %171 = vmatmul.f32.gmra.mxu0 %v144
    %v172 = vpop.f32.mrf.mxu0
    %v173 = vadd.f32 %v131, %v172
    %174 = vdwg.mxu0
    %v175 = vmax.f32 %v164, 0.0
    %v176 = vmax.f32 %v167, 0.0
    %v177 = vmax.f32 %v170, 0.0
    %v178 = vmax.f32 %v173, 0.0
    %v179 = vld [vmem:[%s5] sm:$0xff]
    %v180 = vld [vmem:[%s5 + $0x8] sm:$0xff]
    %v181 = vld [vmem:[%s5 + $0x10] sm:$0xff]
    %v182 = vld [vmem:[%s5 + $0x18] sm:$0xff]
    %v183 = vld [vmem:[%s6] sm:$0x1]
    %v185 = vperm.slane %v183, 0
    %187 = vxpose.xlu0.b32.start [1/16] %v175, 128
    %188 = vxpose.xlu0.b32.cont [2/16] %v176, 128
    %189 = vxpose.xlu0.b32.cont [3/16] %v177, 128
    %190 = vxpose.xlu0.b32.cont [4/16] %v178, 128
    %191 = vxpose.xlu0.b32.cont [5/16] 0.0, 128
    %192 = vxpose.xlu0.b32.cont [6/16] 0.0, 128
    %193 = vxpose.xlu0.b32.cont [7/16] 0.0, 128
    %194 = vxpose.xlu0.b32.cont [8/16] 0.0, 128
    %195 = vxpose.xlu0.b32.cont [9/16] 0.0, 128
    %196 = vxpose.xlu0.b32.cont [10/16] 0.0, 128
    %197 = vxpose.xlu0.b32.cont [11/16] 0.0, 128
    %198 = vxpose.xlu0.b32.cont [12/16] 0.0, 128
    %199 = vxpose.xlu0.b32.cont [13/16] 0.0, 128
    %200 = vxpose.xlu0.b32.cont [14/16] 0.0, 128
    %201 = vxpose.xlu0.b32.cont [15/16] 0.0, 128
    %202 = vxpose.xlu0.b32.end [16/16] 0.0, 128
    %v203 = vpop.trf.xlu0
    %v204 = vpop.trf.xlu0
    %v205 = vpop.trf.xlu0
    %v206 = vpop.trf.xlu0
    %v207 = vpop.trf.xlu0
    %v208 = vpop.trf.xlu0
    %v209 = vpop.trf.xlu0
    %v210 = vpop.trf.xlu0
    %v211 = vpop.trf.xlu0
    %v212 = vpop.trf.xlu0
    %v213 = vpop.trf.xlu0
    %v214 = vpop.trf.xlu0
    %v215 = vpop.trf.xlu0
    %v216 = vpop.trf.xlu0
    %v217 = vpop.trf.xlu0
    %v218 = vpop.trf.xlu0
    %v220 = vsel %vm133, %v203, 0
    %222 = vmatpush.msra.mxu0 0.0
    %223 = vmatpush.msra.mxu0 0.0
    %224 = vmatpush.msra.mxu0 0.0
    %225 = vmatpush.msra.mxu0 0.0
    %226 = vmatpush.msra.mxu0 0.0
    %227 = vmatpush.msra.mxu0 0.0
    %228 = vmatpush.msra.mxu0 0.0
    %229 = vmatpush.msra.mxu0 0.0
    %230 = vmatpush.msra.mxu0 0.0
    %231 = vmatpush.msra.mxu0 0.0
    %232 = vmatpush.msra.mxu0 0.0
    %233 = vmatpush.msra.mxu0 0.0
    %234 = vmatpush.msra.mxu0 %v182
    %235 = vmatpush.msra.mxu0 %v181
    %236 = vmatpush.msra.mxu0 %v180
    %237 = vmatpush.msra.mxu0 %v179
    %238 = vmatmul.f32.gmra.mxu0 %v220
    %v239 = vpop.f32.mrf.mxu0
    %v240 = vadd.f32 %v185, %v239
    %241 = vdwg.mxu0
    %v242 = vlaneseq
    %v243 = vand.u32 %v242, 127
    %vm244 = vcmp.lt.s32.totalorder %v243, 4
    %v245 = vxor.u32 %v240, 2147483648
    %v246 = vmul.f32 %v245, 1.442695
    %v247 = vpow.pop %v246
    %v248 = vadd.f32 %v247, 1.0
    %v249 = vrcp.pop %v248
    %v250 = vmul.f32 %v248, %v249
    %v251 = vsub.f32 1.0, %v250
    %v252 = vmul.f32 %v249, %v251
    %v253 = vadd.f32 %v249, %v252
    %vm254 = vweird.f32 %v248
    %vm255 = vweird.f32 %v249
    %vm256 = vmor %vm254, %vm255
    %v257 = vsel %vm256, %v249, %v253
    %v258 = vand.u32 2147483647, %v248
    %vm259 = vcmp.eq.f32.partialorder %v258, 8.507059e+37
    %v260 = vand.u32 %v248, 2147483648
    %v261 = vor.u32 1.1754944e-38, %v260
    %v262 = vsel %vm259, %v261, %v257
    %v263 = vmul.f32 1.0, %v262
    %v264 = vsel %vm244, %v240, %v263
    %vm265 = vcmask 64512
    %266 = vst.msk [vmem:[#allocation2] sm:$0xff] %vm265, %v264
    // Predicated region
    $region30: #{tpu_custom_call.1} parent=1 // pred_check
      _
    $region31: #{tpu_custom_call.1} parent=1 // pred_check_branch
      %268 = sbr.rel (0) target = $region33
    $region32: #{tpu_custom_call.1} parent=1 // pred_region
      %270 = vsyncadd [#allocation3], 0
      %s272 = sshll.u32 [#allocation2], 4
      %s273 = int_to_ptr.vmem [resolvable:$true] %s272
      %s274 = sshll.u32 %s7, 4
      %s275 = int_to_ptr.hbm [resolvable:$true] %s274
      %277 = dma.vmem_to_hbm [thread:$0]  %s273, 128, %s275, [#allocation3]
    $region33: #{tpu_custom_call.1} parent=1 // pred_fallthru
      _
    // Predicated region
    $region34: #{tpu_custom_call.1} parent=1 // pred_check
      _
    $region35: #{tpu_custom_call.1} parent=1 // pred_check_branch
      %279 = sbr.rel (0) target = $region37
    $region36: #{tpu_custom_call.1} parent=1 // pred_region
      %281 = dma.done [#allocation3], 128
    $region37: #{tpu_custom_call.1} parent=1 // pred_fallthru
      _
    %282 = vsyncpa [#allocation3], 1

</llo_original>
